<compile_context>
chip_gen: v7x
topology: tpu7x:2x2x1
jax: 0.10.0
libtpu: 0.0.40
codegen_flags: <defaults>
</compile_context>

<pallas_src>
import functools

import jax
import jax.numpy as jnp
from jax import lax
from jax.experimental import pallas as pl
from jax.experimental.pallas import tpu as pltpu


def _round_up(a, b):
    return (a + b - 1) // b * b


def _r8(v):
    return _round_up(max(int(v), 1), 8)


def _vmem_capacity_bytes():
    try:
        info = pltpu.get_tpu_info()
        cap = int(getattr(info, "vmem_capacity_bytes", 0))
        if cap > 0:
            return cap
    except Exception:
        pass
    return 64 * 1024 * 1024        # conservative (v7x-sized) default


def _make_kernel(K, stride, C_in_g, TL):
    """One fused MXU matmul per tile: (C_out_g, K*C_in_g) @ (K*C_in_g, TL)."""

    if K == 1:
        def kernel(x_ref, w_ref, b_ref, o_ref):
            # x_ref: (stride, C_in_g, TL); single tap is (s=0, d=0)
            acc = jnp.dot(w_ref[...], x_ref[0],
                          preferred_element_type=jnp.float32)
            o_ref[...] = (acc + b_ref[...]).astype(o_ref.dtype)
        return kernel

    def kernel(x_ref, w_ref, b_ref, o_ref, unfold_ref):
        # x_ref:      (stride, C_in_g, TL + HW)  stride-factored tile incl. halo
        # w_ref:      (C_out_g, K*C_in_g)        per-group fused filter
        # b_ref:      (C_out_g, 1)
        # o_ref:      (C_out_g, TL)
        # unfold_ref: (K*C_in_g, TL)             VMEM scratch (im2col window)
        # tap k reads input column t*stride + k == (t + k//stride)*stride + (k%stride)
        for k in range(K):                    # K is small & static -> unrolled
            s, d = k % stride, k // stride
            unfold_ref[k * C_in_g:(k + 1) * C_in_g, :] = x_ref[s, :, d:d + TL]
        acc = jnp.dot(w_ref[...], unfold_ref[...],
                      preferred_element_type=jnp.float32)
        o_ref[...] = (acc + b_ref[...]).astype(o_ref.dtype)

    return kernel


@functools.partial(jax.jit, static_argnames=("stride", "groups", "tile_cap"))
def my_conv1d_pad_same(x, weight, bias, *, stride, groups=1, tile_cap=None):
    """Equivalent of MyConv1dPadSame.forward (Conv1d with SAME padding).

    x: (N, C_in, L), weight: (C_out, C_in//groups, K), bias: (C_out,)  [PyTorch layout]
    """
    N, C_in, L = x.shape
    C_out, C_in_g, K = weight.shape
    assert C_in == C_in_g * groups and C_out % groups == 0
    G = groups
    C_out_g = C_out // G
    KC = K * C_in_g
    itemsize = jnp.dtype(x.dtype).itemsize

    # --- SAME padding arithmetic (identical to the PyTorch module) ---
    L_out = (L + stride - 1) // stride
    p = max(0, (L_out - 1) * stride + K - L)
    pad_left = p // 2

    # --- generation-aware VMEM budget / tile size ---
    cap = _vmem_capacity_bytes()
    vmem_limit = int(min(max(cap - 16 * 2**20, 32 * 2**20), 96 * 2**20))
    budget = int(min(cap // 3, 32 * 2**20))

    # per-output-column resident bytes: double-buffered input & output tiles,
    # unfold scratch, and the f32 accumulator vregs.
    bytes_per_col = ((2 * stride * _r8(C_in_g) + 2 * _r8(C_out_g) + _r8(KC))
                     * itemsize + 4 * _r8(C_out_g))
    TL = max(128, budget // max(bytes_per_col, 1) // 128 * 128)
    TL = min(TL, 2048)
    # keep the (C_out_g, TL) f32 accumulator <= ~128 KiB of vregs
    TL = min(TL, max(128, (32768 // max(C_out_g, 1)) // 128 * 128))
    if tile_cap is not None:
        TL = min(TL, max(128, tile_cap // 128 * 128))
    # give both v7x TensorCores work when batch*groups gives only one grid row
    if G * N == 1 and L_out >= 1024:
        TL = min(TL, _round_up(-(-L_out // 2), 128))

    if L_out <= TL:
        n_tiles, TL = 1, L_out            # single full tile (block == full dim)
    else:
        n_tiles = -(-L_out // TL)         # last output tile is partial (masked)

    HW = (K - 1) // stride                # halo width in stride-factored columns
    TW = TL + HW
    T_total = n_tiles * TL + HW
    L_need = T_total * stride

    # --- pad + stride-factor (stride==1: just a pad + trivial reshape) ---
    x_p = jnp.pad(x, ((0, 0), (0, 0), (pad_left, L_need - L - pad_left)))
    x_g = x_p.reshape(N, G, C_in_g, L_need)
    # x_s[n, g, s, c, t] = x_padded[n, g*C_in_g + c, t*stride + s]
    x_s = x_g.reshape(N, G, C_in_g, T_total, stride).transpose(0, 1, 4, 2, 3)

    if n_tiles == 1:
        x_t = x_s[:, :, None]                             # (N,G,1,stride,C_in_g,TW)
    else:
        # overlapping tiles with the halo baked in (one fused gather pass)
        idx = jnp.arange(n_tiles)[:, None] * TL + jnp.arange(TW)[None, :]
        x_t = jnp.take(x_s, idx, axis=4)                  # (N,G,stride,C_in_g,n_tiles,TW)
        x_t = x_t.transpose(0, 1, 4, 2, 3, 5)             # (N,G,n_tiles,stride,C_in_g,TW)

    # fused-contraction weight layout: row = c_out, col = k*C_in_g + c_in
    w2 = weight.reshape(G, C_out_g, C_in_g, K).transpose(0, 1, 3, 2).reshape(G, C_out_g, KC)
    b2 = bias.reshape(G, C_out_g, 1)

    kernel = _make_kernel(K, stride, C_in_g, TL)
    scratch = [] if K == 1 else [pltpu.VMEM((KC, TL), x.dtype)]

    flops = 2 * N * G * C_out_g * KC * n_tiles * TL
    bytes_accessed = ((x_t.size + w2.size + b2.size) * itemsize
                      + N * C_out * L_out * itemsize)

    out = pl.pallas_call(
        kernel,
        out_shape=jax.ShapeDtypeStruct((N, G, C_out_g, L_out), x.dtype),
        grid_spec=pltpu.PrefetchScalarGridSpec(
            num_scalar_prefetch=0,
            # group axis outermost: the weight/bias block index is constant
            # along the inner (batch, L-tile) axes -> no redundant weight DMA.
            grid=(G, N, n_tiles),
            in_specs=[
                pl.BlockSpec((None, None, None, stride, C_in_g, TW),
                             lambda g, n, l: (n, g, l, 0, 0, 0)),
                pl.BlockSpec((None, C_out_g, KC),
                             lambda g, n, l: (g, 0, 0)),
                pl.BlockSpec((None, C_out_g, 1),
                             lambda g, n, l: (g, 0, 0)),
            ],
            out_specs=pl.BlockSpec((None, None, C_out_g, TL),
                                   lambda g, n, l: (n, g, 0, l)),
            scratch_shapes=scratch,
        ),
        compiler_params=pltpu.CompilerParams(
            dimension_semantics=("parallel", "parallel", "parallel"),
            vmem_limit_bytes=vmem_limit,
        ),
        cost_estimate=pl.CostEstimate(flops=flops, transcendentals=0,
                                      bytes_accessed=bytes_accessed),
    )(x_t, w2, b2)

    return out.reshape(N, C_out, L_out)


def _reference_conv1d_pad_same(x, weight, bias, *, stride, groups=1):
    """Pure-JAX reference using lax.conv_general_dilated (mirrors PyTorch semantics)."""
    L = x.shape[-1]
    K = weight.shape[-1]
    L_out = (L + stride - 1) // stride
    p = max(0, (L_out - 1) * stride + K - L)
    pad_left = p // 2
    pad_right = p - pad_left
    y = lax.conv_general_dilated(
        x, weight,
        window_strides=(stride,),
        padding=[(pad_left, pad_right)],
        dimension_numbers=("NCH", "OIH", "NCH"),
        feature_group_count=groups,
    )
    return y + bias[None, :, None]


if __name__ == "__main__":
    def run_case(key, N, C_in, L, C_out, K, stride, groups, tile_cap=None):
        kx, kw, kb = jax.random.split(key, 3)
        x = jax.random.normal(kx, (N, C_in, L), dtype=jnp.float32)
        fan_in = (C_in // groups) * K
        bound = 1.0 / float(fan_in) ** 0.5
        weight = jax.random.uniform(kw, (C_out, C_in // groups, K),
                                    minval=-bound, maxval=bound, dtype=jnp.float32)
        bias = jax.random.uniform(kb, (C_out,), minval=-bound, maxval=bound,
                                  dtype=jnp.float32)

        y = jax.block_until_ready(my_conv1d_pad_same(
            x, weight, bias, stride=stride, groups=groups, tile_cap=tile_cap))
        y_ref = _reference_conv1d_pad_same(x, weight, bias, stride=stride, groups=groups)

        L_out = (L + stride - 1) // stride
        assert y.shape == y_ref.shape == (N, C_out, L_out)
        assert jnp.allclose(y, y_ref, atol=1e-4, rtol=1e-4), \
            float(jnp.max(jnp.abs(y - y_ref)))

    key = jax.random.PRNGKey(0)
    k1, k2, k3 = jax.random.split(key, 3)
    # primary small case (matches the module's typical usage)
    run_case(k1, N=2, C_in=4, L=16, C_out=8, K=3, stride=2, groups=1)
    # groups > 1, stride 1, wider halo, single-tile path
    run_case(k2, N=2, C_in=8, L=700, C_out=8, K=5, stride=1, groups=2)
    # force the multi-tile path: overlapping halo tiles + partial (masked) last block
    run_case(k3, N=2, C_in=8, L=700, C_out=8, K=5, stride=1, groups=2, tile_cap=256)

    print("KERNEL_OK")
</pallas_src>

<mosaic_0001>
module attributes {stable_mosaic.version = 11 : i64} {
  func.func @kernel(%arg0: i32, %arg1: i32, %arg2: i32, %arg3: memref<1x1x1x2x4x9xf32, #tpu.memory_space<vmem>>, %arg4: memref<1x8x12xf32, #tpu.memory_space<vmem>>, %arg5: memref<1x8x1xf32, #tpu.memory_space<vmem>>, %arg6: memref<1x1x8x8xf32, #tpu.memory_space<vmem>>, %arg7: memref<12x8xf32, #tpu.memory_space<vmem>>) attributes {dimension_semantics = [#tpu.dimension_semantics<parallel>, #tpu.dimension_semantics<parallel>, #tpu.dimension_semantics<parallel>], iteration_bounds = array<i64: 1, 2, 1>, scalar_prefetch = 0 : i64, scratch_operands = 1 : i64, tpu.core_type = #tpu.core_type<tc>, window_params = [{transform_indices = @transform_0, window_bounds = array<i64: 1, 1, 1, 2, 4, 9>}, {transform_indices = @transform_1, window_bounds = array<i64: 1, 8, 12>}, {transform_indices = @transform_2, window_bounds = array<i64: 1, 8, 1>}, {transform_indices = @transform_3, window_bounds = array<i64: 1, 1, 8, 8>}]} {
    %c0 = arith.constant 0 : index
    %c0_0 = arith.constant 0 : index
    %c0_1 = arith.constant 0 : index
    %c0_2 = arith.constant 0 : index
    %c0_3 = arith.constant 0 : index
    %c0_4 = arith.constant 0 : index
    %0 = vector.load %arg3[%c0, %c0_0, %c0_1, %c0_2, %c0_3, %c0_4] : memref<1x1x1x2x4x9xf32, #tpu.memory_space<vmem>>, vector<1x1x1x1x4x8xf32>
    %1 = vector.shape_cast %0 : vector<1x1x1x1x4x8xf32> to vector<4x8xf32>
    %c0_5 = arith.constant 0 : index
    %c0_6 = arith.constant 0 : index
    %2 = vector.load %arg7[%c0_5, %c0_6] : memref<12x8xf32, #tpu.memory_space<vmem>>, vector<4x8xf32>
    tpu.vector_store %arg7[%c0_5, %c0_6], %1 {strides = array<i32>} : memref<12x8xf32, #tpu.memory_space<vmem>>, vector<4x8xf32>,
    %c0_7 = arith.constant 0 : index
    %c0_8 = arith.constant 0 : index
    %c0_9 = arith.constant 0 : index
    %c1 = arith.constant 1 : index
    %c0_10 = arith.constant 0 : index
    %c0_11 = arith.constant 0 : index
    %3 = vector.load %arg3[%c0_7, %c0_8, %c0_9, %c1, %c0_10, %c0_11] : memref<1x1x1x2x4x9xf32, #tpu.memory_space<vmem>>, vector<1x1x1x1x4x8xf32>
    %4 = vector.shape_cast %3 : vector<1x1x1x1x4x8xf32> to vector<4x8xf32>
    %c4 = arith.constant 4 : index
    %c0_12 = arith.constant 0 : index
    %5 = vector.load %arg7[%c4, %c0_12] : memref<12x8xf32, #tpu.memory_space<vmem>>, vector<4x8xf32>
    tpu.vector_store %arg7[%c4, %c0_12], %4 {strides = array<i32>} : memref<12x8xf32, #tpu.memory_space<vmem>>, vector<4x8xf32>,
    %c0_13 = arith.constant 0 : index
    %c0_14 = arith.constant 0 : index
    %c0_15 = arith.constant 0 : index
    %c0_16 = arith.constant 0 : index
    %c0_17 = arith.constant 0 : index
    %c1_18 = arith.constant 1 : index
    %6 = vector.load %arg3[%c0_13, %c0_14, %c0_15, %c0_16, %c0_17, %c1_18] : memref<1x1x1x2x4x9xf32, #tpu.memory_space<vmem>>, vector<1x1x1x1x4x8xf32>
    %7 = vector.shape_cast %6 : vector<1x1x1x1x4x8xf32> to vector<4x8xf32>
    %c8 = arith.constant 8 : index
    %c0_19 = arith.constant 0 : index
    %8 = vector.load %arg7[%c8, %c0_19] : memref<12x8xf32, #tpu.memory_space<vmem>>, vector<4x8xf32>
    tpu.vector_store %arg7[%c8, %c0_19], %7 {strides = array<i32>} : memref<12x8xf32, #tpu.memory_space<vmem>>, vector<4x8xf32>,
    %c0_20 = arith.constant 0 : index
    %c0_21 = arith.constant 0 : index
    %c0_22 = arith.constant 0 : index
    %9 = vector.load %arg4[%c0_20, %c0_21, %c0_22] : memref<1x8x12xf32, #tpu.memory_space<vmem>>, vector<1x8x12xf32>
    %10 = vector.shape_cast %9 : vector<1x8x12xf32> to vector<8x12xf32>
    %c0_23 = arith.constant 0 : index
    %c0_24 = arith.constant 0 : index
    %11 = vector.load %arg7[%c0_23, %c0_24] : memref<12x8xf32, #tpu.memory_space<vmem>>, vector<12x8xf32>
    %cst = arith.constant dense<0.000000e+00> : vector<8x8xf32>
    %12 = tpu.matmul %10, %11, %cst {dimension_numbers = #tpu.dot_dimension_numbers<[1], [0], [0], [1], [0, 0, 1, 1], [], []>} : vector<8x12xf32>, vector<12x8xf32>, vector<8x8xf32> -> vector<8x8xf32>
    %c0_25 = arith.constant 0 : index
    %c0_26 = arith.constant 0 : index
    %c0_27 = arith.constant 0 : index
    %13 = vector.load %arg5[%c0_25, %c0_26, %c0_27] : memref<1x8x1xf32, #tpu.memory_space<vmem>>, vector<1x8x1xf32>
    %14 = vector.shape_cast %13 : vector<1x8x1xf32> to vector<8x1xf32>
    %15 = vector.broadcast %14 : vector<8x1xf32> to vector<8x8xf32>
    %16 = arith.addf %12, %15 : vector<8x8xf32>
    %c0_28 = arith.constant 0 : index
    %c0_29 = arith.constant 0 : index
    %c0_30 = arith.constant 0 : index
    %c0_31 = arith.constant 0 : index
    %17 = vector.load %arg6[%c0_28, %c0_29, %c0_30, %c0_31] : memref<1x1x8x8xf32, #tpu.memory_space<vmem>>, vector<1x1x8x8xf32>
    %18 = vector.shape_cast %17 : vector<1x1x8x8xf32> to vector<8x8xf32>
    %19 = vector.shape_cast %16 : vector<8x8xf32> to vector<1x1x8x8xf32>
    tpu.vector_store %arg6[%c0_28, %c0_29, %c0_30, %c0_31], %19 {strides = array<i32>} : memref<1x1x8x8xf32, #tpu.memory_space<vmem>>, vector<1x1x8x8xf32>,
    return
  }
  func.func @transform_0(%arg0: i32, %arg1: i32, %arg2: i32) -> (i32, i32, i32, i32, i32, i32) {
    %c0_i32 = arith.constant 0 : i32
    %c0_i32_0 = arith.constant 0 : i32
    %c0_i32_1 = arith.constant 0 : i32
    %c0_i32_2 = arith.constant 0 : i32
    return %arg1, %arg0, %arg2, %c0_i32, %c0_i32_0, %c0_i32_1 : i32, i32, i32, i32, i32, i32
  }
  func.func @transform_1(%arg0: i32, %arg1: i32, %arg2: i32) -> (i32, i32, i32) {
    %c0_i32 = arith.constant 0 : i32
    %c0_i32_0 = arith.constant 0 : i32
    %c0_i32_1 = arith.constant 0 : i32
    return %arg0, %c0_i32, %c0_i32_0 : i32, i32, i32
  }
  func.func @transform_2(%arg0: i32, %arg1: i32, %arg2: i32) -> (i32, i32, i32) {
    %c0_i32 = arith.constant 0 : i32
    %c0_i32_0 = arith.constant 0 : i32
    %c0_i32_1 = arith.constant 0 : i32
    return %arg0, %c0_i32, %c0_i32_0 : i32, i32, i32
  }
  func.func @transform_3(%arg0: i32, %arg1: i32, %arg2: i32) -> (i32, i32, i32, i32) {
    %c0_i32 = arith.constant 0 : i32
    %c0_i32_0 = arith.constant 0 : i32
    return %arg1, %arg0, %c0_i32, %arg2 : i32, i32, i32, i32
  }
}

</mosaic_0001>

<llo_original>
// kernel: my_conv1d_pad_same.1
$region0: #{my_conv1d_pad_same.1}
  #allocation0 [shape = 'u32[]', space=smem, size = 0x4, offset = 0x4, fixed_abs, tag = 'smem constant byte address 0x4 - core index']
  #allocation1 [shape = 'u32[144,128]{1,0:T(1,128)}', space=vmem, size = 0x12000, scoped, tag = 'internal scratch']
  #allocation2 [shape = 'f32[12,8]{1,0:T(8,128)}', space=vmem, size = 0x2000, scoped, tag = 'scratch operand']
  %s0 = inlined_call_operand.vmem [shape: f32[2,1,1,2,4,9], index: 0, kind: input, shape index: {}]
  %s1 = inlined_call_operand.vmem [shape: f32[1,8,12], index: 1, kind: input, shape index: {}]
  %s2 = inlined_call_operand.vmem [shape: f32[1,8,1], index: 2, kind: input, shape index: {}]
  %s3 = inlined_call_operand.hbm [shape: f32[2,1,8,8], index: 3, kind: output, shape index: {}]
  %s4 = sld [smem:[#allocation0]]
  $region45: #{my_conv1d_pad_same.1} parent=0
    _
  %s6 = ssub.s32 1, %s4
  %s7 = scalar_select 0, %s6, %s4
  $region1: #{my_conv1d_pad_same.1} parent=0
    #allocation3 [shape = 'u8[8192]{0}', space=vmem, size = 0x2000, scoped, tag = 'output window, operand 0']
    #allocation4 [shape = 's32[2]{0}', space=sflag, size = 0x8, scoped, tag = 'scoped memory for my_conv1d_pad_same.1']
    %8 = vsyncpa [#allocation4], 0
    %s9 = scalar_lea.sflag [#allocation4], 1
    %10 = vsyncpa %s9, 0
    loop: start=0, step=1, limit=4
    $region2: #{my_conv1d_pad_same.1} parent=1 // loop_pre_header
      _
    $region3: #{my_conv1d_pad_same.1} parent=1 // loop_header
      %s12 = sphi 0, %s16
      %p13 = scmp.ge.s32.totalorder %s12, 4
      %s19 = sphi 0, %s38
      %s20 = sphi 0, %s34
      %s21 = sphi 0, %s30
      %s22 = sphi 0, %s19
      %s23 = sphi 0, %s20
      %s24 = sphi 0, %s21
      %s25 = sphi 0, %s22
      %s26 = sphi 0, %s23
      %s27 = sphi 0, %s24
      %s45 = sphi 0, %s47
      %s48 = sphi 0, %s45
      %s49 = sphi 0, %s48
      %s65 = sphi 0, %s49
      %s71 = sphi 0, %s73
      %s74 = sphi 0, %s71
      %s75 = sphi 0, %s74
      %s91 = sphi 0, %s75
      %s97 = sphi 0, %s99
      %s100 = sphi 0, %s97
      %s101 = sphi 0, %s100
      %s117 = sphi 0, %s101
      %s127 = sphi 0, %s129
      %s130 = sphi 0, %s127
      %s131 = sphi 0, %s130
      %s147 = sphi 0, %s131
    $region4: #{my_conv1d_pad_same.1} parent=1 // loop_header_branch
      %15 = sbr.rel (%p13) target = $region8
    $region5: #{my_conv1d_pad_same.1} parent=1 // loop_body
      %s17 = ssub.s32 %s12, 1
      %s18 = ssub.s32 %s12, 2
      %s28 = sadd.s32 1, %s21
      %p29 = scmp.ge.s32.totalorder %s28, 1
      %s30 = scalar_select %p29, 0, %s28
      %s31 = sadd.s32 1, %s20
      %s32 = scalar_select %p29, %s31, %s20
      %p33 = scmp.ge.s32.totalorder %s32, 2
      %s34 = scalar_select %p33, 0, %s32
      %s35 = sadd.s32 1, %s19
      %s36 = scalar_select %p33, %s35, %s19
      %p37 = scmp.ge.s32.totalorder %s36, 1
      %s38 = scalar_select %p37, 0, %s36
      %s39 = ssub.s32 %s20, %s34
      %s40 = ssub.s32 %s19, %s38
      %s41 = sor.u32 %s39, %s40
      %s42 = ssub.s32 %s21, %s30
      %s43 = sor.u32 %s41, %s42
      %p44 = scmp.eq.s32.totalorder %s43, 0
      %s46 = sadd.s32 %s45, 1
      %s47 = scalar_select %p44, %s45, %s46
      %p50 = pneg %p44
      %p51 = scmp.eq.s32.totalorder %s12, 1
      %p52 = por %p50, %p51
      %p53 = scmp.ne.s32.totalorder %s45, %s48
      %p54 = scmp.eq.s32.totalorder %s12, 0
      %p55 = por %p53, %p54
      %p56 = scmp.ne.s32.totalorder %s45, %s48
      %p57 = scmp.eq.s32.totalorder %s17, 1
      %p58 = por %p56, %p57
      %p59 = scmp.ne.s32.totalorder %s48, %s49
      %p60 = scmp.eq.s32.totalorder %s17, 0
      %p61 = por %p59, %p60
      %p62 = scmp.ne.s32.totalorder %s48, %s49
      %p63 = scmp.eq.s32.totalorder %s18, 1
      %p64 = por %p62, %p63
      %p66 = scmp.ne.s32.totalorder %s49, %s65
      %p67 = scmp.eq.s32.totalorder %s18, 0
      %p68 = por %p66, %p67
      %s69 = ssub.s32 %s19, %s38
      %p70 = scmp.eq.s32.totalorder %s69, 0
      %s72 = sadd.s32 %s71, 1
      %s73 = scalar_select %p70, %s71, %s72
      %p76 = pneg %p70
      %p77 = scmp.eq.s32.totalorder %s12, 1
      %p78 = por %p76, %p77
      %p79 = scmp.ne.s32.totalorder %s71, %s74
      %p80 = scmp.eq.s32.totalorder %s12, 0
      %p81 = por %p79, %p80
      %p82 = scmp.ne.s32.totalorder %s71, %s74
      %p83 = scmp.eq.s32.totalorder %s17, 1
      %p84 = por %p82, %p83
      %p85 = scmp.ne.s32.totalorder %s74, %s75
      %p86 = scmp.eq.s32.totalorder %s17, 0
      %p87 = por %p85, %p86
      %p88 = scmp.ne.s32.totalorder %s74, %s75
      %p89 = scmp.eq.s32.totalorder %s18, 1
      %p90 = por %p88, %p89
      %p92 = scmp.ne.s32.totalorder %s75, %s91
      %p93 = scmp.eq.s32.totalorder %s18, 0
      %p94 = por %p92, %p93
      %s95 = ssub.s32 %s19, %s38
      %p96 = scmp.eq.s32.totalorder %s95, 0
      %s98 = sadd.s32 %s97, 1
      %s99 = scalar_select %p96, %s97, %s98
      %p102 = pneg %p96
      %p103 = scmp.eq.s32.totalorder %s12, 1
      %p104 = por %p102, %p103
      %p105 = scmp.ne.s32.totalorder %s97, %s100
      %p106 = scmp.eq.s32.totalorder %s12, 0
      %p107 = por %p105, %p106
      %p108 = scmp.ne.s32.totalorder %s97, %s100
      %p109 = scmp.eq.s32.totalorder %s17, 1
      %p110 = por %p108, %p109
      %p111 = scmp.ne.s32.totalorder %s100, %s101
      %p112 = scmp.eq.s32.totalorder %s17, 0
      %p113 = por %p111, %p112
      %p114 = scmp.ne.s32.totalorder %s100, %s101
      %p115 = scmp.eq.s32.totalorder %s18, 1
      %p116 = por %p114, %p115
      %p118 = scmp.ne.s32.totalorder %s101, %s117
      %p119 = scmp.eq.s32.totalorder %s18, 0
      %p120 = por %p118, %p119
      %s121 = ssub.s32 %s20, %s34
      %s122 = ssub.s32 %s19, %s38
      %s123 = sor.u32 %s121, %s122
      %s124 = ssub.s32 %s21, %s30
      %s125 = sor.u32 %s123, %s124
      %p126 = scmp.eq.s32.totalorder %s125, 0
      %s128 = sadd.s32 %s127, 1
      %s129 = scalar_select %p126, %s127, %s128
      %p132 = pneg %p126
      %p133 = scmp.eq.s32.totalorder %s12, 1
      %p134 = por %p132, %p133
      %p135 = scmp.ne.s32.totalorder %s127, %s130
      %p136 = scmp.eq.s32.totalorder %s12, 0
      %p137 = por %p135, %p136
      %p138 = scmp.ne.s32.totalorder %s127, %s130
      %p139 = scmp.eq.s32.totalorder %s17, 1
      %p140 = por %p138, %p139
      %p141 = scmp.ne.s32.totalorder %s130, %s131
      %p142 = scmp.eq.s32.totalorder %s17, 0
      %p143 = por %p141, %p142
      %p144 = scmp.ne.s32.totalorder %s130, %s131
      %p145 = scmp.eq.s32.totalorder %s18, 1
      %p146 = por %p144, %p145
      %p148 = scmp.ne.s32.totalorder %s131, %s147
      %p149 = scmp.eq.s32.totalorder %s18, 0
      %p150 = por %p148, %p149
      %p151 = scmp.le.s32.totalorder 1, %s12
      %p152 = scmp.lt.s32.totalorder %s12, 3
      %p153 = pnand %p151, %p152
      %p154 = pneg %p153
      // Predicated region
      $region9: #{my_conv1d_pad_same.1} parent=5 // pred_check
        _
      $region10: #{my_conv1d_pad_same.1} parent=5 // pred_check_branch
        %156 = sbr.rel (%p153) target = $region12
      $region11: #{my_conv1d_pad_same.1} parent=5 // pred_region
        %s157 = ssub.s32 %s12, 1
        // Predicated region
        $region13: #{my_conv1d_pad_same.1} parent=11 // pred_check
          %p158 = pneg %p87
        $region14: #{my_conv1d_pad_same.1} parent=11 // pred_check_branch
          %160 = sbr.rel (%p158) target = $region16
        $region15: #{my_conv1d_pad_same.1} parent=11 // pred_region
          %p161 = scmp.lt.s32.totalorder %s22, 0
          %s162 = scalar_select %p161, %s22, 0
          %s163 = smul.addr %s162, 8
          %s164 = scalar_lea.vmem %s1, %s163
        $region16: #{my_conv1d_pad_same.1} parent=11 // pred_fallthru
          _
        // Predicated region
        $region17: #{my_conv1d_pad_same.1} parent=11 // pred_check
          %p165 = pneg %p113
        $region18: #{my_conv1d_pad_same.1} parent=11 // pred_check_branch
          %167 = sbr.rel (%p165) target = $region20
        $region19: #{my_conv1d_pad_same.1} parent=11 // pred_region
          %p168 = scmp.lt.s32.totalorder %s22, 0
          %s169 = scalar_select %p168, %s22, 0
          %s170 = smul.addr %s169, 8
          %s171 = scalar_lea.vmem %s2, %s170
        $region20: #{my_conv1d_pad_same.1} parent=11 // pred_fallthru
          _
      $region12: #{my_conv1d_pad_same.1} parent=5 // pred_fallthru
        _
      %p172 = scmp.lt.s32.totalorder %s12, 2
      // Predicated region
      $region21: #{my_conv1d_pad_same.1} parent=5 // pred_check
        %p173 = pneg %p172
      $region22: #{my_conv1d_pad_same.1} parent=5 // pred_check_branch
        %175 = sbr.rel (%p173) target = $region24
      $region23: #{my_conv1d_pad_same.1} parent=5 // pred_region
        // Predicated region
        $region25: #{my_conv1d_pad_same.1} parent=23 // pred_check
          %p176 = pneg %p55
        $region26: #{my_conv1d_pad_same.1} parent=23 // pred_check_branch
          %178 = sbr.rel (%p176) target = $region28
        $region27: #{my_conv1d_pad_same.1} parent=23 // pred_region
          %p179 = scmp.lt.s32.totalorder %s20, 1
          %s180 = scalar_select %p179, %s20, 1
          %p181 = scmp.lt.s32.totalorder %s19, 0
          %s182 = scalar_select %p181, %s19, 0
          %p183 = scmp.lt.s32.totalorder %s21, 0
          %s184 = scalar_select %p183, %s21, 0
          %s185 = smul.addr %s184, 2
          %s186 = smul.addr %s182, 2
          %s187 = sadd.s32 %s185, %s186
          %s188 = smul.addr %s180, 2
          %s189 = sadd.s32 %s187, %s188
          %s190 = smul.addr %s189, 4
          %s191 = scalar_lea.vmem %s0, %s190
        $region28: #{my_conv1d_pad_same.1} parent=23 // pred_fallthru
          _
      $region24: #{my_conv1d_pad_same.1} parent=5 // pred_fallthru
        _
      %p192 = scmp.le.s32.totalorder 1, %s12
      %p193 = scmp.lt.s32.totalorder %s12, 3
      %p194 = pnand %p192, %p193
      %p195 = pneg %p194
      // Predicated region
      $region29: #{my_conv1d_pad_same.1} parent=5 // pred_check
        _
      $region30: #{my_conv1d_pad_same.1} parent=5 // pred_check_branch
        %197 = sbr.rel (%p194) target = $region32
      $region31: #{my_conv1d_pad_same.1} parent=5 // pred_region
        %s198 = ssub.s32 %s12, 1
        %p199 = scmp.lt.s32.totalorder %s23, 1
        %s200 = scalar_select %p199, %s23, 1
        %p201 = scmp.lt.s32.totalorder %s22, 0
        %s202 = scalar_select %p201, %s22, 0
        %p203 = scmp.lt.s32.totalorder %s24, 0
        %s204 = scalar_select %p203, %s24, 0
        %s205 = smul.addr %s204, 2
        %s206 = smul.addr %s202, 2
        %s207 = sadd.s32 %s205, %s206
        %s208 = smul.addr %s200, 2
        %s209 = sadd.s32 %s207, %s208
        %s210 = smul.addr %s209, 4
        %s211 = scalar_lea.vmem %s0, %s210
        %p212 = pneg %p61
        %p213 = pneg %p58
        %p214 = scmp.lt.s32.totalorder %s22, 0
        %s215 = scalar_select %p214, %s22, 0
        %s216 = smul.addr %s215, 8
        %s217 = scalar_lea.vmem %s1, %s216
        %p218 = pneg %p87
        %p219 = pneg %p84
        %p220 = scmp.lt.s32.totalorder %s22, 0
        %s221 = scalar_select %p220, %s22, 0
        %s222 = smul.addr %s221, 8
        %s223 = scalar_lea.vmem %s2, %s222
        %p224 = pneg %p113
        %p225 = pneg %p110
        %p226 = pneg %p143
        %p227 = pneg %p140
        %s228 = sand.u32 %s130, 1
        %s229 = scalar_lea.sflag [#allocation4], %s228
        %s230 = sand.u32 %s130, 1
        %s231 = smul.addr %s230, 8
        %s232 = scalar_lea.vmem [#allocation3], %s231
        %p233 = scmp.lt.s32.totalorder %s23, 1
        %s234 = scalar_select %p233, %s23, 1
        %p235 = scmp.lt.s32.totalorder %s22, 0
        %s236 = scalar_select %p235, %s22, 0
        %p237 = scmp.lt.s32.totalorder %s24, 0
        %s238 = scalar_select %p237, %s24, 0
        %s239 = smul.addr %s238, 2
        %s240 = smul.addr %s236, 2
        %s241 = sadd.s32 %s239, %s240
        %s242 = smul.addr %s234, 2
        %s243 = sadd.s32 %s241, %s242
        %s244 = smul.addr %s243, 4
        %s245 = scalar_lea.vmem %s0, %s244
        %p246 = scmp.lt.s32.totalorder %s22, 0
        %s247 = scalar_select %p246, %s22, 0
        %s248 = smul.addr %s247, 8
        %s249 = scalar_lea.vmem %s1, %s248
        %p250 = scmp.lt.s32.totalorder %s22, 0
        %s251 = scalar_select %p250, %s22, 0
        %s252 = smul.addr %s251, 8
        %s253 = scalar_lea.vmem %s2, %s252
        %v254 = vld [vmem:[%s245] sm:$0xf]
        %vm255 = vcmask 60416
        %256 = vst.msk [vmem:[#allocation2] sm:$0xf] %vm255, %v254
        %s257 = scalar_lea.vmem %s245, 4
        %v258 = vld [vmem:[%s257] sm:$0xf]
        %259 = vst.msk [vmem:[#allocation2 + $0x4] sm:$0xf] %vm255, %v258
        %v260 = vld [vmem:[%s245] sm:$0xf]
        %262 = vrot.lane.b32.xlu0 %v260, 127
        %v263 = vpop.permute.xlu0 %262
        %265 = vst.msk [vmem:[#allocation2 + $0x8] sm:$0xf] %vm255, %v263
        %v266 = vld [vmem:[%s249] sm:$0xff]
        %v267 = vld [vmem:[#allocation2] sm:$0xff]
        %v268 = vld [vmem:[#allocation2 + $0x8] sm:$0xf]
        %v269 = vld [vmem:[%s253] sm:$0xff]
        %271 = vset.pattern.permute.xlu0 0
        %272 = vperm.xlu0 %271, %v269
        %v273 = vpop.permute.xlu0 %272
        %vm275 = vcmask 97280
        %v277 = vsel %vm275, %v266, 0
        %vm279 = vcmask 1043456
        %v281 = vsel %vm279, %v268, 0
        %283 = vmatprep.subr.mxu0 0.0
        %284 = vmatpush1.msra.mxu0 %v267
        %285 = vmatprep.subr.mxu0 0.0
        %286 = vmatpush1.msra.mxu0 %v281
        %287 = vmatprep.subr.mxu0 0.0
        %288 = vmatpush1.msra.mxu0 0.0
        %289 = vmatprep.subr.mxu0 0.0
        %290 = vmatpush1.msra.mxu0 0.0
        %291 = vmatprep.subr.mxu0 0.0
        %292 = vmatpush1.msra.mxu0 0.0
        %293 = vmatprep.subr.mxu0 0.0
        %294 = vmatpush1.msra.mxu0 0.0
        %295 = vmatprep.subr.mxu0 0.0
        %296 = vmatpush1.msra.mxu0 0.0
        %297 = vmatprep.subr.mxu0 0.0
        %298 = vmatpush1.msra.mxu0 0.0
        %299 = vmatprep.subr.mxu0 0.0
        %300 = vmatpush1.msra.mxu0 0.0
        %301 = vmatprep.subr.mxu0 0.0
        %302 = vmatpush1.msra.mxu0 0.0
        %303 = vmatprep.subr.mxu0 0.0
        %304 = vmatpush1.msra.mxu0 0.0
        %305 = vmatprep.subr.mxu0 0.0
        %306 = vmatpush1.msra.mxu0 0.0
        %307 = vmatprep.subr.mxu0 0.0
        %308 = vmatpush1.msra.mxu0 0.0
        %309 = vmatprep.subr.mxu0 0.0
        %310 = vmatpush1.msra.mxu0 0.0
        %311 = vmatprep.subr.mxu0 0.0
        %312 = vmatpush1.msra.mxu0 0.0
        %313 = vmatprep.subr.mxu0 0.0
        %314 = vmatpush1.msra.mxu0 0.0
        %315 = vmatprep.subr.mxu0 0.0
        %316 = vmatpush1.msra.mxu0 0.0
        %317 = vmatprep.subr.mxu0 0.0
        %318 = vmatpush1.msra.mxu0 0.0
        %319 = vmatprep.subr.mxu0 0.0
        %320 = vmatpush1.msra.mxu0 0.0
        %321 = vmatprep.subr.mxu0 0.0
        %322 = vmatpush1.msra.mxu0 0.0
        %323 = vmatprep.subr.mxu0 0.0
        %324 = vmatpush1.msra.mxu0 0.0
        %325 = vmatprep.subr.mxu0 0.0
        %326 = vmatpush1.msra.mxu0 0.0
        %327 = vmatprep.subr.mxu0 0.0
        %328 = vmatpush1.msra.mxu0 0.0
        %329 = vmatprep.subr.mxu0 0.0
        %330 = vmatpush1.msra.mxu0 0.0
        %331 = vmatprep.subr.mxu0 0.0
        %332 = vmatpush1.msra.mxu0 0.0
        %333 = vmatprep.subr.mxu0 0.0
        %334 = vmatpush1.msra.mxu0 0.0
        %335 = vmatprep.subr.mxu0 0.0
        %336 = vmatpush1.msra.mxu0 0.0
        %337 = vmatprep.subr.mxu0 0.0
        %338 = vmatpush1.msra.mxu0 0.0
        %339 = vmatprep.subr.mxu0 0.0
        %340 = vmatpush1.msra.mxu0 0.0
        %341 = vmatprep.subr.mxu0 0.0
        %342 = vmatpush1.msra.mxu0 0.0
        %343 = vmatprep.subr.mxu0 0.0
        %344 = vmatpush1.msra.mxu0 0.0
        %345 = vmatprep.subr.mxu0 0.0
        %346 = vmatpush1.msra.mxu0 0.0
        %347 = vmatprep.mubr.f32.mxu0 0.0
        %348 = vmatmul.mubr.f32.gmra.mrb[0].mxu0 %v277
        %v349 = vpop.f32.mrb[0].mxu0
        %v350 = vadd.f32 %v273, %v349
        %v351 = vpop.f32.mrb[0].mxu0
        %352 = vdwg.mxu0
        %vm353 = vcmask 64512
        %354 = vst.msk [vmem:[%s232] sm:$0xff] %vm353, %v350
        %s355 = sand.u32 %s130, 1
        %s356 = scalar_lea.sflag [#allocation4], %s355
        %s357 = sand.u32 %s130, 1
        %s358 = smul.addr %s357, 8
        %s359 = scalar_lea.vmem [#allocation3], %s358
        // Predicated region
        $region33: #{my_conv1d_pad_same.1} parent=31 // pred_check
          %p360 = pneg %p140
        $region34: #{my_conv1d_pad_same.1} parent=31 // pred_check_branch
          %362 = sbr.rel (%p360) target = $region36
        $region35: #{my_conv1d_pad_same.1} parent=31 // pred_region
          %s364 = ssub.s32 128, 128
          %365 = vsyncadd %s356, %s364
          %s366 = sadd.s32 %s24, %s22
          %s367 = sadd.s32 %s366, %s23
          %s368 = smul.addr %s367, 128
          %s369 = scalar_lea.hbm %s3, %s368
          %s371 = sshll.u32 %s359, 4
          %s372 = int_to_ptr.vmem [resolvable:$true] %s371
          %374 = dma.vmem_to_hbm [thread:$0]  %s372, 128, %s369, %s356
        $region36: #{my_conv1d_pad_same.1} parent=31 // pred_fallthru
          _
      $region32: #{my_conv1d_pad_same.1} parent=5 // pred_fallthru
        _
      %p375 = scmp.le.s32.totalorder 2, %s12
      // Predicated region
      $region37: #{my_conv1d_pad_same.1} parent=5 // pred_check
        %p376 = pneg %p375
      $region38: #{my_conv1d_pad_same.1} parent=5 // pred_check_branch
        %378 = sbr.rel (%p376) target = $region40
      $region39: #{my_conv1d_pad_same.1} parent=5 // pred_region
        %s379 = ssub.s32 %s12, 2
        // Predicated region
        $region41: #{my_conv1d_pad_same.1} parent=39 // pred_check
          %p380 = pneg %p146
        $region42: #{my_conv1d_pad_same.1} parent=39 // pred_check_branch
          %382 = sbr.rel (%p380) target = $region44
        $region43: #{my_conv1d_pad_same.1} parent=39 // pred_region
          %s383 = sand.u32 %s131, 1
          %s384 = scalar_lea.sflag [#allocation4], %s383
          %s385 = sand.u32 %s131, 1
          %s386 = smul.addr %s385, 8
          %s387 = scalar_lea.vmem [#allocation3], %s386
          %388 = dma.done %s384, 128
        $region44: #{my_conv1d_pad_same.1} parent=39 // pred_fallthru
          _
      $region40: #{my_conv1d_pad_same.1} parent=5 // pred_fallthru
        _
    $region6: #{my_conv1d_pad_same.1} parent=1 // loop_footer
      %s16 = sadd.s32 1, %s12
    $region7: #{my_conv1d_pad_same.1} parent=1 // loop_footer_branch
      %11 = sbr.rel target = $region3
    $region8: #{my_conv1d_pad_same.1} parent=1 // loop_exit
      _
    %389 = vsyncpa [#allocation4], 1
    %s390 = scalar_lea.sflag [#allocation4], 1
    %391 = vsyncpa %s390, 1

</llo_original>
